<compile_context>
chip_gen: v5e
topology: v5e:2x2
jax: 0.10.0
libtpu: 0.0.40
codegen_flags: <defaults>
</compile_context>

<pallas_src>
import jax
import jax.numpy as jnp
import numpy as np
from jax.experimental import pallas as pl
from jax.experimental.pallas import tpu as pltpu

INPUT_DIM = 3
OUTPUT_DIM = 3
HIDDEN_LAYERS = 8
HIDDEN_SIZE = 50
N_HID = HIDDEN_LAYERS - 1   # 7 hidden->hidden layers

D = 128        # padded hidden width (one lane-register width)
IN_PAD = 8     # padded input feature width  (narrow slab, full-dim block)
OUT_PAD = 8    # padded output feature width (narrow slab, full-dim block)
MAX_TM = 1024  # batch tile cap


def _round_up(n, m):
    return ((n + m - 1) // m) * m


def _pinn_kernel(x_ref, w_in_ref, b_in_ref, w_hid_ref, b_hid_ref,
                 w_out_ref, b_out_ref, out_ref):
    x = x_ref[...]                                   # (TM, 8) f32

    # Layer 0 on the VPU: 3 broadcast FMAs in full f32 (K=3 is too small to
    # be worth an MXU pass; also keeps (x, y, t) coordinates at f32).
    pre = x[:, 0:1] * w_in_ref[0:1, :]
    for j in range(1, INPUT_DIM):
        pre = pre + x[:, j:j + 1] * w_in_ref[j:j + 1, :]
    pre = pre + b_in_ref[...]
    h = jnp.tanh(pre)                                # (TM, 128); lanes >= 50 stay 0

    # 7 hidden layers: bf16 operands on the native MXU path, f32 accumulation.
    # Per-layer ref loads keep only one (128,128) weight tile live at a time.
    for i in range(N_HID):
        pre = jnp.dot(h.astype(jnp.bfloat16), w_hid_ref[i],
                      preferred_element_type=jnp.float32) + b_hid_ref[i]
        h = jnp.tanh(pre)

    # Output layer: (TM,128) x (128,8) -> narrow 8-lane output slab.
    out_ref[...] = (
        jnp.dot(h.astype(jnp.bfloat16), w_out_ref[...],
                preferred_element_type=jnp.float32)
        + b_out_ref[...]
    )


@jax.jit
def pinn_forward(x, params):
    """x: (N, 3) float32. Returns (u, v, p), each (N, 1) float32."""
    n = x.shape[0]
    tm = min(MAX_TM, _round_up(max(n, 1), 8))
    n_pad = _round_up(n, tm)
    grid = (n_pad // tm,)

    x_p = jnp.zeros((n_pad, IN_PAD), jnp.float32).at[:n, :INPUT_DIM].set(
        x.astype(jnp.float32))

    # Pad parameters into lane-aligned slabs (hidden/out weights in bf16).
    w_in_p = (jnp.zeros((IN_PAD, D), jnp.float32)
              .at[:INPUT_DIM, :HIDDEN_SIZE].set(params["w_in"]))
    b_in_p = jnp.zeros((1, D), jnp.float32).at[0, :HIDDEN_SIZE].set(params["b_in"])
    w_hid_p = (jnp.zeros((N_HID, D, D), jnp.float32)
               .at[:, :HIDDEN_SIZE, :HIDDEN_SIZE].set(params["w_hid"])
               ).astype(jnp.bfloat16)
    b_hid_p = (jnp.zeros((N_HID, 1, D), jnp.float32)
               .at[:, 0, :HIDDEN_SIZE].set(params["b_hid"]))
    w_out_p = (jnp.zeros((D, OUT_PAD), jnp.float32)
               .at[:HIDDEN_SIZE, :OUTPUT_DIM].set(params["w_out"])
               ).astype(jnp.bfloat16)
    b_out_p = jnp.zeros((1, OUT_PAD), jnp.float32).at[0, :OUTPUT_DIM].set(params["b_out"])

    flops_per_row = 2 * INPUT_DIM * D + N_HID * 2 * D * D + 2 * D * OUT_PAD
    weight_bytes = (w_in_p.size * 4 + b_in_p.size * 4 + w_hid_p.size * 2
                    + b_hid_p.size * 4 + w_out_p.size * 2 + b_out_p.size * 4)
    cost = pl.CostEstimate(
        flops=n_pad * flops_per_row,
        transcendentals=n_pad * HIDDEN_LAYERS * D,
        bytes_accessed=n_pad * (IN_PAD + OUT_PAD) * 4 + weight_bytes,
    )

    out = pl.pallas_call(
        _pinn_kernel,
        out_shape=jax.ShapeDtypeStruct((n_pad, OUT_PAD), jnp.float32),
        grid_spec=pltpu.PrefetchScalarGridSpec(
            num_scalar_prefetch=0,
            grid=grid,
            in_specs=[
                pl.BlockSpec((tm, IN_PAD), lambda i: (i, 0)),        # x tile
                # Constant block indices below -> fetched once, not re-DMA'd
                # per grid step by the Pallas pipeline.
                pl.BlockSpec((IN_PAD, D), lambda i: (0, 0)),         # w_in (f32)
                pl.BlockSpec((1, D), lambda i: (0, 0)),              # b_in
                pl.BlockSpec((N_HID, D, D), lambda i: (0, 0, 0)),    # w_hid (bf16)
                pl.BlockSpec((N_HID, 1, D), lambda i: (0, 0, 0)),    # b_hid
                pl.BlockSpec((D, OUT_PAD), lambda i: (0, 0)),        # w_out (bf16)
                pl.BlockSpec((1, OUT_PAD), lambda i: (0, 0)),        # b_out
            ],
            out_specs=pl.BlockSpec((tm, OUT_PAD), lambda i: (i, 0)),
        ),
        compiler_params=pltpu.CompilerParams(
            dimension_semantics=("parallel",),
        ),
        cost_estimate=cost,
    )(x_p, w_in_p, b_in_p, w_hid_p, b_hid_p, w_out_p, b_out_p)

    out = out[:n, :OUTPUT_DIM]
    return out[:, 0:1], out[:, 1:2], out[:, 2:3]


def init_params(key):
    """Deterministic synthetic init matching the PyTorch module's shapes."""
    keys = jax.random.split(key, 2 * (HIDDEN_LAYERS + 1) + 1)
    k = iter(keys)

    def lin_init(kw, kb, fan_in, fan_out):
        bound = 1.0 / np.sqrt(fan_in)
        w = jax.random.uniform(kw, (fan_in, fan_out), jnp.float32, -bound, bound)
        b = jax.random.uniform(kb, (fan_out,), jnp.float32, -bound, bound)
        return w, b

    w_in, b_in = lin_init(next(k), next(k), INPUT_DIM, HIDDEN_SIZE)
    w_hid, b_hid = [], []
    for _ in range(N_HID):
        w, b = lin_init(next(k), next(k), HIDDEN_SIZE, HIDDEN_SIZE)
        w_hid.append(w)
        b_hid.append(b)
    w_out, b_out = lin_init(next(k), next(k), HIDDEN_SIZE, OUTPUT_DIM)
    return {
        "w_in": w_in, "b_in": b_in,
        "w_hid": jnp.stack(w_hid), "b_hid": jnp.stack(b_hid),
        "w_out": w_out, "b_out": b_out,
        "log_mu": jnp.zeros((1,), jnp.float32),  # not used in forward
    }


def get_mu(params):
    return jnp.exp(params["log_mu"])


def _reference_forward_f32(x, params):
    """Pure f32 reference (matches the PyTorch module exactly)."""
    h = jnp.tanh(x @ params["w_in"] + params["b_in"])
    for i in range(N_HID):
        h = jnp.tanh(h @ params["w_hid"][i] + params["b_hid"][i])
    out = h @ params["w_out"] + params["b_out"]
    return out[:, 0:1], out[:, 1:2], out[:, 2:3]


def _reference_forward_mixed(x, params):
    """Mirrors the kernel's mixed precision (f32 layer 0, bf16 MXU dots, f32 acc)."""
    pre = x[:, 0:1] * params["w_in"][0:1, :]
    for j in range(1, INPUT_DIM):
        pre = pre + x[:, j:j + 1] * params["w_in"][j:j + 1, :]
    h = jnp.tanh(pre + params["b_in"])
    for i in range(N_HID):
        w = params["w_hid"][i].astype(jnp.bfloat16)
        h = jnp.tanh(jnp.dot(h.astype(jnp.bfloat16), w,
                             preferred_element_type=jnp.float32)
                     + params["b_hid"][i])
    w = params["w_out"].astype(jnp.bfloat16)
    out = (jnp.dot(h.astype(jnp.bfloat16), w,
                   preferred_element_type=jnp.float32) + params["b_out"])
    return out[:, 0:1], out[:, 1:2], out[:, 2:3]


if __name__ == "__main__":
    key = jax.random.PRNGKey(0)
    kp, kx = jax.random.split(key)
    params = init_params(kp)

    for N in (8, 257):  # small batches; 257 exercises padding / odd batch
        x = jax.random.normal(jax.random.fold_in(kx, N), (N, INPUT_DIM), jnp.float32)

        u, v, p = pinn_forward(x, params)
        jax.block_until_ready((u, v, p))
        assert u.shape == (N, 1) and v.shape == (N, 1) and p.shape == (N, 1)

        # Tight check vs. a reference that emulates the kernel's precision.
        um, vm, pm = _reference_forward_mixed(x, params)
        for got, want in ((u, um), (v, vm), (p, pm)):
            np.testing.assert_allclose(np.asarray(got), np.asarray(want),
                                       rtol=5e-3, atol=5e-3)

        # Loose check vs. the pure-f32 PyTorch-equivalent reference
        # (bf16 matmul operands -> looser tolerance).
        uf, vf, pf = _reference_forward_f32(x, params)
        for got, want in ((u, uf), (v, vf), (p, pf)):
            np.testing.assert_allclose(np.asarray(got), np.asarray(want),
                                       rtol=5e-2, atol=5e-2)

    print("KERNEL_OK")
</pallas_src>

<mosaic_0001>
module attributes {stable_mosaic.version = 11 : i64} {
  func.func @_pinn_kernel(%arg0: i32, %arg1: memref<8x8xf32, #tpu.memory_space<vmem>>, %arg2: memref<8x128xf32, #tpu.memory_space<vmem>>, %arg3: memref<1x128xf32, #tpu.memory_space<vmem>>, %arg4: memref<7x128x128xbf16, #tpu.memory_space<vmem>>, %arg5: memref<7x1x128xf32, #tpu.memory_space<vmem>>, %arg6: memref<128x8xbf16, #tpu.memory_space<vmem>>, %arg7: memref<1x8xf32, #tpu.memory_space<vmem>>, %arg8: memref<8x8xf32, #tpu.memory_space<vmem>>) attributes {dimension_semantics = [#tpu.dimension_semantics<parallel>], iteration_bounds = array<i64: 1>, scalar_prefetch = 0 : i64, scratch_operands = 0 : i64, tpu.core_type = #tpu.core_type<tc>, window_params = [{transform_indices = @transform_0, window_bounds = array<i64: 8, 8>}, {pipeline_mode = #tpu.pipeline_mode<synchronous>, transform_indices = @transform_1, window_bounds = array<i64: 8, 128>}, {pipeline_mode = #tpu.pipeline_mode<synchronous>, transform_indices = @transform_2, window_bounds = array<i64: 1, 128>}, {pipeline_mode = #tpu.pipeline_mode<synchronous>, transform_indices = @transform_3, window_bounds = array<i64: 7, 128, 128>}, {pipeline_mode = #tpu.pipeline_mode<synchronous>, transform_indices = @transform_4, window_bounds = array<i64: 7, 1, 128>}, {pipeline_mode = #tpu.pipeline_mode<synchronous>, transform_indices = @transform_5, window_bounds = array<i64: 128, 8>}, {pipeline_mode = #tpu.pipeline_mode<synchronous>, transform_indices = @transform_6, window_bounds = array<i64: 1, 8>}, {transform_indices = @transform_7, window_bounds = array<i64: 8, 8>}]} {
    %c0 = arith.constant 0 : index
    %c0_0 = arith.constant 0 : index
    %0 = vector.load %arg1[%c0, %c0_0] : memref<8x8xf32, #tpu.memory_space<vmem>>, vector<8x8xf32>
    %1 = vector.extract_strided_slice %0 {offsets = [0, 0], sizes = [8, 1], strides = [1, 1]} : vector<8x8xf32> to vector<8x1xf32>
    %c0_1 = arith.constant 0 : index
    %c0_2 = arith.constant 0 : index
    %2 = vector.load %arg2[%c0_1, %c0_2] : memref<8x128xf32, #tpu.memory_space<vmem>>, vector<1x128xf32>
    %3 = vector.broadcast %1 : vector<8x1xf32> to vector<8x128xf32>
    %4 = vector.broadcast %2 : vector<1x128xf32> to vector<8x128xf32>
    %5 = arith.mulf %3, %4 : vector<8x128xf32>
    %6 = vector.extract_strided_slice %0 {offsets = [0, 1], sizes = [8, 1], strides = [1, 1]} : vector<8x8xf32> to vector<8x1xf32>
    %c1 = arith.constant 1 : index
    %c0_3 = arith.constant 0 : index
    %7 = vector.load %arg2[%c1, %c0_3] : memref<8x128xf32, #tpu.memory_space<vmem>>, vector<1x128xf32>
    %8 = vector.broadcast %6 : vector<8x1xf32> to vector<8x128xf32>
    %9 = vector.broadcast %7 : vector<1x128xf32> to vector<8x128xf32>
    %10 = arith.mulf %8, %9 : vector<8x128xf32>
    %11 = arith.addf %5, %10 : vector<8x128xf32>
    %12 = vector.extract_strided_slice %0 {offsets = [0, 2], sizes = [8, 1], strides = [1, 1]} : vector<8x8xf32> to vector<8x1xf32>
    %c2 = arith.constant 2 : index
    %c0_4 = arith.constant 0 : index
    %13 = vector.load %arg2[%c2, %c0_4] : memref<8x128xf32, #tpu.memory_space<vmem>>, vector<1x128xf32>
    %14 = vector.broadcast %12 : vector<8x1xf32> to vector<8x128xf32>
    %15 = vector.broadcast %13 : vector<1x128xf32> to vector<8x128xf32>
    %16 = arith.mulf %14, %15 : vector<8x128xf32>
    %17 = arith.addf %11, %16 : vector<8x128xf32>
    %c0_5 = arith.constant 0 : index
    %c0_6 = arith.constant 0 : index
    %18 = vector.load %arg3[%c0_5, %c0_6] : memref<1x128xf32, #tpu.memory_space<vmem>>, vector<1x128xf32>
    %19 = vector.broadcast %18 : vector<1x128xf32> to vector<8x128xf32>
    %20 = arith.addf %17, %19 : vector<8x128xf32>
    %21 = math.tanh %20 : vector<8x128xf32>
    %22 = arith.truncf %21 : vector<8x128xf32> to vector<8x128xbf16>
    %c0_7 = arith.constant 0 : index
    %c0_8 = arith.constant 0 : index
    %c0_9 = arith.constant 0 : index
    %23 = vector.load %arg4[%c0_7, %c0_8, %c0_9] : memref<7x128x128xbf16, #tpu.memory_space<vmem>>, vector<1x128x128xbf16>
    %24 = vector.shape_cast %23 : vector<1x128x128xbf16> to vector<128x128xbf16>
    %cst = arith.constant dense<0.000000e+00> : vector<8x128xf32>
    %25 = tpu.matmul %22, %24, %cst {dimension_numbers = #tpu.dot_dimension_numbers<[1], [0], [0], [1], [0, 0, 1, 1], [], []>} : vector<8x128xbf16>, vector<128x128xbf16>, vector<8x128xf32> -> vector<8x128xf32>
    %c0_10 = arith.constant 0 : index
    %c0_11 = arith.constant 0 : index
    %c0_12 = arith.constant 0 : index
    %26 = vector.load %arg5[%c0_10, %c0_11, %c0_12] : memref<7x1x128xf32, #tpu.memory_space<vmem>>, vector<1x1x128xf32>
    %27 = vector.shape_cast %26 : vector<1x1x128xf32> to vector<1x128xf32>
    %28 = vector.broadcast %27 : vector<1x128xf32> to vector<8x128xf32>
    %29 = arith.addf %25, %28 : vector<8x128xf32>
    %30 = math.tanh %29 : vector<8x128xf32>
    %31 = arith.truncf %30 : vector<8x128xf32> to vector<8x128xbf16>
    %c1_13 = arith.constant 1 : index
    %c0_14 = arith.constant 0 : index
    %c0_15 = arith.constant 0 : index
    %32 = vector.load %arg4[%c1_13, %c0_14, %c0_15] : memref<7x128x128xbf16, #tpu.memory_space<vmem>>, vector<1x128x128xbf16>
    %33 = vector.shape_cast %32 : vector<1x128x128xbf16> to vector<128x128xbf16>
    %cst_16 = arith.constant dense<0.000000e+00> : vector<8x128xf32>
    %34 = tpu.matmul %31, %33, %cst_16 {dimension_numbers = #tpu.dot_dimension_numbers<[1], [0], [0], [1], [0, 0, 1, 1], [], []>} : vector<8x128xbf16>, vector<128x128xbf16>, vector<8x128xf32> -> vector<8x128xf32>
    %c1_17 = arith.constant 1 : index
    %c0_18 = arith.constant 0 : index
    %c0_19 = arith.constant 0 : index
    %35 = vector.load %arg5[%c1_17, %c0_18, %c0_19] : memref<7x1x128xf32, #tpu.memory_space<vmem>>, vector<1x1x128xf32>
    %36 = vector.shape_cast %35 : vector<1x1x128xf32> to vector<1x128xf32>
    %37 = vector.broadcast %36 : vector<1x128xf32> to vector<8x128xf32>
    %38 = arith.addf %34, %37 : vector<8x128xf32>
    %39 = math.tanh %38 : vector<8x128xf32>
    %40 = arith.truncf %39 : vector<8x128xf32> to vector<8x128xbf16>
    %c2_20 = arith.constant 2 : index
    %c0_21 = arith.constant 0 : index
    %c0_22 = arith.constant 0 : index
    %41 = vector.load %arg4[%c2_20, %c0_21, %c0_22] : memref<7x128x128xbf16, #tpu.memory_space<vmem>>, vector<1x128x128xbf16>
    %42 = vector.shape_cast %41 : vector<1x128x128xbf16> to vector<128x128xbf16>
    %cst_23 = arith.constant dense<0.000000e+00> : vector<8x128xf32>
    %43 = tpu.matmul %40, %42, %cst_23 {dimension_numbers = #tpu.dot_dimension_numbers<[1], [0], [0], [1], [0, 0, 1, 1], [], []>} : vector<8x128xbf16>, vector<128x128xbf16>, vector<8x128xf32> -> vector<8x128xf32>
    %c2_24 = arith.constant 2 : index
    %c0_25 = arith.constant 0 : index
    %c0_26 = arith.constant 0 : index
    %44 = vector.load %arg5[%c2_24, %c0_25, %c0_26] : memref<7x1x128xf32, #tpu.memory_space<vmem>>, vector<1x1x128xf32>
    %45 = vector.shape_cast %44 : vector<1x1x128xf32> to vector<1x128xf32>
    %46 = vector.broadcast %45 : vector<1x128xf32> to vector<8x128xf32>
    %47 = arith.addf %43, %46 : vector<8x128xf32>
    %48 = math.tanh %47 : vector<8x128xf32>
    %49 = arith.truncf %48 : vector<8x128xf32> to vector<8x128xbf16>
    %c3 = arith.constant 3 : index
    %c0_27 = arith.constant 0 : index
    %c0_28 = arith.constant 0 : index
    %50 = vector.load %arg4[%c3, %c0_27, %c0_28] : memref<7x128x128xbf16, #tpu.memory_space<vmem>>, vector<1x128x128xbf16>
    %51 = vector.shape_cast %50 : vector<1x128x128xbf16> to vector<128x128xbf16>
    %cst_29 = arith.constant dense<0.000000e+00> : vector<8x128xf32>
    %52 = tpu.matmul %49, %51, %cst_29 {dimension_numbers = #tpu.dot_dimension_numbers<[1], [0], [0], [1], [0, 0, 1, 1], [], []>} : vector<8x128xbf16>, vector<128x128xbf16>, vector<8x128xf32> -> vector<8x128xf32>
    %c3_30 = arith.constant 3 : index
    %c0_31 = arith.constant 0 : index
    %c0_32 = arith.constant 0 : index
    %53 = vector.load %arg5[%c3_30, %c0_31, %c0_32] : memref<7x1x128xf32, #tpu.memory_space<vmem>>, vector<1x1x128xf32>
    %54 = vector.shape_cast %53 : vector<1x1x128xf32> to vector<1x128xf32>
    %55 = vector.broadcast %54 : vector<1x128xf32> to vector<8x128xf32>
    %56 = arith.addf %52, %55 : vector<8x128xf32>
    %57 = math.tanh %56 : vector<8x128xf32>
    %58 = arith.truncf %57 : vector<8x128xf32> to vector<8x128xbf16>
    %c4 = arith.constant 4 : index
    %c0_33 = arith.constant 0 : index
    %c0_34 = arith.constant 0 : index
    %59 = vector.load %arg4[%c4, %c0_33, %c0_34] : memref<7x128x128xbf16, #tpu.memory_space<vmem>>, vector<1x128x128xbf16>
    %60 = vector.shape_cast %59 : vector<1x128x128xbf16> to vector<128x128xbf16>
    %cst_35 = arith.constant dense<0.000000e+00> : vector<8x128xf32>
    %61 = tpu.matmul %58, %60, %cst_35 {dimension_numbers = #tpu.dot_dimension_numbers<[1], [0], [0], [1], [0, 0, 1, 1], [], []>} : vector<8x128xbf16>, vector<128x128xbf16>, vector<8x128xf32> -> vector<8x128xf32>
    %c4_36 = arith.constant 4 : index
    %c0_37 = arith.constant 0 : index
    %c0_38 = arith.constant 0 : index
    %62 = vector.load %arg5[%c4_36, %c0_37, %c0_38] : memref<7x1x128xf32, #tpu.memory_space<vmem>>, vector<1x1x128xf32>
    %63 = vector.shape_cast %62 : vector<1x1x128xf32> to vector<1x128xf32>
    %64 = vector.broadcast %63 : vector<1x128xf32> to vector<8x128xf32>
    %65 = arith.addf %61, %64 : vector<8x128xf32>
    %66 = math.tanh %65 : vector<8x128xf32>
    %67 = arith.truncf %66 : vector<8x128xf32> to vector<8x128xbf16>
    %c5 = arith.constant 5 : index
    %c0_39 = arith.constant 0 : index
    %c0_40 = arith.constant 0 : index
    %68 = vector.load %arg4[%c5, %c0_39, %c0_40] : memref<7x128x128xbf16, #tpu.memory_space<vmem>>, vector<1x128x128xbf16>
    %69 = vector.shape_cast %68 : vector<1x128x128xbf16> to vector<128x128xbf16>
    %cst_41 = arith.constant dense<0.000000e+00> : vector<8x128xf32>
    %70 = tpu.matmul %67, %69, %cst_41 {dimension_numbers = #tpu.dot_dimension_numbers<[1], [0], [0], [1], [0, 0, 1, 1], [], []>} : vector<8x128xbf16>, vector<128x128xbf16>, vector<8x128xf32> -> vector<8x128xf32>
    %c5_42 = arith.constant 5 : index
    %c0_43 = arith.constant 0 : index
    %c0_44 = arith.constant 0 : index
    %71 = vector.load %arg5[%c5_42, %c0_43, %c0_44] : memref<7x1x128xf32, #tpu.memory_space<vmem>>, vector<1x1x128xf32>
    %72 = vector.shape_cast %71 : vector<1x1x128xf32> to vector<1x128xf32>
    %73 = vector.broadcast %72 : vector<1x128xf32> to vector<8x128xf32>
    %74 = arith.addf %70, %73 : vector<8x128xf32>
    %75 = math.tanh %74 : vector<8x128xf32>
    %76 = arith.truncf %75 : vector<8x128xf32> to vector<8x128xbf16>
    %c6 = arith.constant 6 : index
    %c0_45 = arith.constant 0 : index
    %c0_46 = arith.constant 0 : index
    %77 = vector.load %arg4[%c6, %c0_45, %c0_46] : memref<7x128x128xbf16, #tpu.memory_space<vmem>>, vector<1x128x128xbf16>
    %78 = vector.shape_cast %77 : vector<1x128x128xbf16> to vector<128x128xbf16>
    %cst_47 = arith.constant dense<0.000000e+00> : vector<8x128xf32>
    %79 = tpu.matmul %76, %78, %cst_47 {dimension_numbers = #tpu.dot_dimension_numbers<[1], [0], [0], [1], [0, 0, 1, 1], [], []>} : vector<8x128xbf16>, vector<128x128xbf16>, vector<8x128xf32> -> vector<8x128xf32>
    %c6_48 = arith.constant 6 : index
    %c0_49 = arith.constant 0 : index
    %c0_50 = arith.constant 0 : index
    %80 = vector.load %arg5[%c6_48, %c0_49, %c0_50] : memref<7x1x128xf32, #tpu.memory_space<vmem>>, vector<1x1x128xf32>
    %81 = vector.shape_cast %80 : vector<1x1x128xf32> to vector<1x128xf32>
    %82 = vector.broadcast %81 : vector<1x128xf32> to vector<8x128xf32>
    %83 = arith.addf %79, %82 : vector<8x128xf32>
    %84 = math.tanh %83 : vector<8x128xf32>
    %85 = arith.truncf %84 : vector<8x128xf32> to vector<8x128xbf16>
    %c0_51 = arith.constant 0 : index
    %c0_52 = arith.constant 0 : index
    %86 = vector.load %arg6[%c0_51, %c0_52] : memref<128x8xbf16, #tpu.memory_space<vmem>>, vector<128x8xbf16>
    %cst_53 = arith.constant dense<0.000000e+00> : vector<8x8xf32>
    %87 = tpu.matmul %85, %86, %cst_53 {dimension_numbers = #tpu.dot_dimension_numbers<[1], [0], [0], [1], [0, 0, 1, 1], [], []>} : vector<8x128xbf16>, vector<128x8xbf16>, vector<8x8xf32> -> vector<8x8xf32>
    %c0_54 = arith.constant 0 : index
    %c0_55 = arith.constant 0 : index
    %88 = vector.load %arg7[%c0_54, %c0_55] : memref<1x8xf32, #tpu.memory_space<vmem>>, vector<1x8xf32>
    %89 = vector.broadcast %88 : vector<1x8xf32> to vector<8x8xf32>
    %90 = arith.addf %87, %89 : vector<8x8xf32>
    %c0_56 = arith.constant 0 : index
    %c0_57 = arith.constant 0 : index
    %91 = vector.load %arg8[%c0_56, %c0_57] : memref<8x8xf32, #tpu.memory_space<vmem>>, vector<8x8xf32>
    tpu.vector_store %arg8[%c0_56, %c0_57], %90 {strides = array<i32>} : memref<8x8xf32, #tpu.memory_space<vmem>>, vector<8x8xf32>,
    return
  }
  func.func @transform_0(%arg0: i32) -> (i32, i32) {
    %c0_i32 = arith.constant 0 : i32
    %c0_i32_0 = arith.constant 0 : i32
    return %arg0, %c0_i32 : i32, i32
  }
  func.func @transform_1(%arg0: i32) -> (i32, i32) {
    %c0_i32 = arith.constant 0 : i32
    %c0_i32_0 = arith.constant 0 : i32
    %c0_i32_1 = arith.constant 0 : i32
    return %c0_i32, %c0_i32_0 : i32, i32
  }
  func.func @transform_2(%arg0: i32) -> (i32, i32) {
    %c0_i32 = arith.constant 0 : i32
    %c0_i32_0 = arith.constant 0 : i32
    %c0_i32_1 = arith.constant 0 : i32
    return %c0_i32, %c0_i32_0 : i32, i32
  }
  func.func @transform_3(%arg0: i32) -> (i32, i32, i32) {
    %c0_i32 = arith.constant 0 : i32
    %c0_i32_0 = arith.constant 0 : i32
    %c0_i32_1 = arith.constant 0 : i32
    %c0_i32_2 = arith.constant 0 : i32
    return %c0_i32, %c0_i32_0, %c0_i32_1 : i32, i32, i32
  }
  func.func @transform_4(%arg0: i32) -> (i32, i32, i32) {
    %c0_i32 = arith.constant 0 : i32
    %c0_i32_0 = arith.constant 0 : i32
    %c0_i32_1 = arith.constant 0 : i32
    %c0_i32_2 = arith.constant 0 : i32
    return %c0_i32, %c0_i32_0, %c0_i32_1 : i32, i32, i32
  }
  func.func @transform_5(%arg0: i32) -> (i32, i32) {
    %c0_i32 = arith.constant 0 : i32
    %c0_i32_0 = arith.constant 0 : i32
    %c0_i32_1 = arith.constant 0 : i32
    return %c0_i32, %c0_i32_0 : i32, i32
  }
  func.func @transform_6(%arg0: i32) -> (i32, i32) {
    %c0_i32 = arith.constant 0 : i32
    %c0_i32_0 = arith.constant 0 : i32
    %c0_i32_1 = arith.constant 0 : i32
    return %c0_i32, %c0_i32_0 : i32, i32
  }
  func.func @transform_7(%arg0: i32) -> (i32, i32) {
    %c0_i32 = arith.constant 0 : i32
    %c0_i32_0 = arith.constant 0 : i32
    return %arg0, %c0_i32 : i32, i32
  }
}

</mosaic_0001>

<llo_original>
// kernel: pinn_forward.1
$region0: #{pinn_forward.1}
  #allocation0 [shape = 'u32[]', space=smem, size = 0x4, offset = 0x4, fixed_abs, tag = 'smem constant byte address 0x4 - core index']
  #allocation1 [shape = 'u32[72,128]{1,0:T(1,128)}', space=vmem, size = 0x9000, scoped, tag = 'internal scratch']
  %s0 = inlined_call_operand.vmem [shape: f32[8,8], index: 0, kind: input, shape index: {}]
  %s1 = inlined_call_operand.vmem [shape: f32[8,128], index: 1, kind: input, shape index: {}]
  %s2 = inlined_call_operand.vmem [shape: f32[1,128], index: 2, kind: input, shape index: {}]
  %s3 = inlined_call_operand.vmem [shape: bf16[7,128,128], index: 3, kind: input, shape index: {}]
  %s4 = inlined_call_operand.vmem [shape: f32[7,1,128], index: 4, kind: input, shape index: {}]
  %s5 = inlined_call_operand.vmem [shape: bf16[128,8], index: 5, kind: input, shape index: {}]
  %s6 = inlined_call_operand.vmem [shape: f32[1,8], index: 6, kind: input, shape index: {}]
  %s7 = inlined_call_operand.vmem [shape: f32[8,8], index: 7, kind: output, shape index: {}]
  %s8 = sld [smem:[#allocation0]]
  $region38: #{pinn_forward.1} parent=0
    _
  %s10 = ssub.s32 1, %s8
  %s11 = scalar_select 0, %s10, %s8
  // Predicated region
  $region2: #{pinn_forward.1} parent=0 // pred_check
    _
  $region3: #{pinn_forward.1} parent=0 // pred_check_branch
    %13 = sbr.rel (0) target = $region5
  $region4: #{pinn_forward.1} parent=0 // pred_region
    _
  $region5: #{pinn_forward.1} parent=0 // pred_fallthru
    _
  // Predicated region
  $region6: #{pinn_forward.1} parent=0 // pred_check
    _
  $region7: #{pinn_forward.1} parent=0 // pred_check_branch
    %15 = sbr.rel (0) target = $region9
  $region8: #{pinn_forward.1} parent=0 // pred_region
    _
  $region9: #{pinn_forward.1} parent=0 // pred_fallthru
    _
  // Predicated region
  $region10: #{pinn_forward.1} parent=0 // pred_check
    _
  $region11: #{pinn_forward.1} parent=0 // pred_check_branch
    %17 = sbr.rel (0) target = $region13
  $region12: #{pinn_forward.1} parent=0 // pred_region
    _
  $region13: #{pinn_forward.1} parent=0 // pred_fallthru
    _
  // Predicated region
  $region14: #{pinn_forward.1} parent=0 // pred_check
    _
  $region15: #{pinn_forward.1} parent=0 // pred_check_branch
    %19 = sbr.rel (0) target = $region17
  $region16: #{pinn_forward.1} parent=0 // pred_region
    _
  $region17: #{pinn_forward.1} parent=0 // pred_fallthru
    _
  // Predicated region
  $region18: #{pinn_forward.1} parent=0 // pred_check
    _
  $region19: #{pinn_forward.1} parent=0 // pred_check_branch
    %21 = sbr.rel (0) target = $region21
  $region20: #{pinn_forward.1} parent=0 // pred_region
    _
  $region21: #{pinn_forward.1} parent=0 // pred_fallthru
    _
  // Predicated region
  $region22: #{pinn_forward.1} parent=0 // pred_check
    _
  $region23: #{pinn_forward.1} parent=0 // pred_check_branch
    %23 = sbr.rel (0) target = $region25
  $region24: #{pinn_forward.1} parent=0 // pred_region
    _
  $region25: #{pinn_forward.1} parent=0 // pred_fallthru
    _
  // Predicated region
  $region26: #{pinn_forward.1} parent=0 // pred_check
    _
  $region27: #{pinn_forward.1} parent=0 // pred_check_branch
    %25 = sbr.rel (0) target = $region29
  $region28: #{pinn_forward.1} parent=0 // pred_region
    _
  $region29: #{pinn_forward.1} parent=0 // pred_fallthru
    _
  %v26 = vld [vmem:[%s0] sm:$0xff]
  %v27 = vld [vmem:[%s1] sm:$0x1]
  %29 = vset.pattern.permute.xlu0 0
  %30 = vperm.xlu0 %29, %v26
  %v31 = vpop.permute.xlu0 %30
  %v33 = vperm.slane %v27, 0
  %v34 = vmul.f32 %v31, %v33
  %v35 = vld [vmem:[%s1 + $0x1] sm:$0x1]
  %36 = vset.pattern.permute.xlu0 1
  %37 = vperm.xlu0 %36, %v26
  %v38 = vpop.permute.xlu0 %37
  %v40 = vperm.slane %v35, 0
  %v41 = vmul.f32 %v38, %v40
  %v42 = vadd.f32 %v34, %v41
  %v43 = vld [vmem:[%s1 + $0x2] sm:$0x1]
  %44 = vset.pattern.permute.xlu0 2
  %45 = vperm.xlu0 %44, %v26
  %v46 = vpop.permute.xlu0 %45
  %v48 = vperm.slane %v43, 0
  %v49 = vmul.f32 %v46, %v48
  %v50 = vadd.f32 %v42, %v49
  %v51 = vld [vmem:[%s2] sm:$0x1]
  %v53 = vperm.slane %v51, 0
  %v55 = vadd.f32 %v50, %v53
  %v56 = vtanh.pop %v55
  %v57 = vpack.c.bf16 %v56, %v56
  %v58 = vld [vmem:[%s3] sm:$0xf]
  %v59 = vld [vmem:[%s3 + $0x4] sm:$0xf]
  %v60 = vld [vmem:[%s3 + $0x8] sm:$0xf]
  %v61 = vld [vmem:[%s3 + $0xc] sm:$0xf]
  %v62 = vld [vmem:[%s3 + $0x10] sm:$0xf]
  %v63 = vld [vmem:[%s3 + $0x14] sm:$0xf]
  %v64 = vld [vmem:[%s3 + $0x18] sm:$0xf]
  %v65 = vld [vmem:[%s3 + $0x1c] sm:$0xf]
  %v66 = vld [vmem:[%s3 + $0x20] sm:$0xf]
  %v67 = vld [vmem:[%s3 + $0x24] sm:$0xf]
  %v68 = vld [vmem:[%s3 + $0x28] sm:$0xf]
  %v69 = vld [vmem:[%s3 + $0x2c] sm:$0xf]
  %v70 = vld [vmem:[%s3 + $0x30] sm:$0xf]
  %v71 = vld [vmem:[%s3 + $0x34] sm:$0xf]
  %v72 = vld [vmem:[%s3 + $0x38] sm:$0xf]
  %v73 = vld [vmem:[%s3 + $0x3c] sm:$0xf]
  %v74 = vld [vmem:[%s4] sm:$0x1]
  %v76 = vperm.slane %v74, 0
  %v94 = vunpack.c.l.b16 %v58
  %v95 = vunpack.c.l.b16 %v59
  %v96 = vunpack.c.l.b16 %v60
  %v97 = vunpack.c.l.b16 %v61
  %v98 = vunpack.c.l.b16 %v62
  %v99 = vunpack.c.l.b16 %v63
  %v100 = vunpack.c.l.b16 %v64
  %v101 = vunpack.c.l.b16 %v65
  %v102 = vunpack.c.l.b16 %v66
  %v103 = vunpack.c.l.b16 %v67
  %v104 = vunpack.c.l.b16 %v68
  %v105 = vunpack.c.l.b16 %v69
  %v106 = vunpack.c.l.b16 %v70
  %v107 = vunpack.c.l.b16 %v71
  %v108 = vunpack.c.l.b16 %v72
  %v109 = vunpack.c.l.b16 %v73
  %v110 = vpack.c.b16 %v95, %v94
  %v111 = vpack.c.b16 %v97, %v96
  %v112 = vpack.c.b16 %v99, %v98
  %v113 = vpack.c.b16 %v101, %v100
  %v114 = vpack.c.b16 %v103, %v102
  %v115 = vpack.c.b16 %v105, %v104
  %v116 = vpack.c.b16 %v107, %v106
  %v117 = vpack.c.b16 %v109, %v108
  %126 = vmatpush.bf16.msra.mxu0 %v117
  %127 = vmatpush.bf16.msra.mxu0 %v116
  %128 = vmatpush.bf16.msra.mxu0 %v115
  %129 = vmatpush.bf16.msra.mxu0 %v114
  %130 = vmatpush.bf16.msra.mxu0 %v113
  %131 = vmatpush.bf16.msra.mxu0 %v112
  %132 = vmatpush.bf16.msra.mxu0 %v111
  %133 = vmatpush.bf16.msra.mxu0 %v110
  %134 = vmatmul.bf16.gmra.mxu0 %v57
  %v135 = vpop.f32.mrf.mxu0
  %v136 = vadd.f32 %v76, %v135
  %v137 = vpop.f32.mrf.mxu0
  %138 = vdwg.mxu0
  %v139 = vtanh.pop %v136
  %v140 = vpack.c.bf16 %v139, %v139
  %s141 = scalar_lea.vmem %s3, 64
  %v142 = vld [vmem:[%s141] sm:$0xf]
  %v143 = vld [vmem:[%s141 + $0x4] sm:$0xf]
  %v144 = vld [vmem:[%s141 + $0x8] sm:$0xf]
  %v145 = vld [vmem:[%s141 + $0xc] sm:$0xf]
  %v146 = vld [vmem:[%s141 + $0x10] sm:$0xf]
  %v147 = vld [vmem:[%s141 + $0x14] sm:$0xf]
  %v148 = vld [vmem:[%s141 + $0x18] sm:$0xf]
  %v149 = vld [vmem:[%s141 + $0x1c] sm:$0xf]
  %v150 = vld [vmem:[%s141 + $0x20] sm:$0xf]
  %v151 = vld [vmem:[%s141 + $0x24] sm:$0xf]
  %v152 = vld [vmem:[%s141 + $0x28] sm:$0xf]
  %v153 = vld [vmem:[%s141 + $0x2c] sm:$0xf]
  %v154 = vld [vmem:[%s141 + $0x30] sm:$0xf]
  %v155 = vld [vmem:[%s141 + $0x34] sm:$0xf]
  %v156 = vld [vmem:[%s141 + $0x38] sm:$0xf]
  %v157 = vld [vmem:[%s141 + $0x3c] sm:$0xf]
  %s158 = scalar_lea.vmem %s4, 1
  %v159 = vld [vmem:[%s158] sm:$0x1]
  %v161 = vperm.slane %v159, 0
  %v179 = vunpack.c.l.b16 %v142
  %v180 = vunpack.c.l.b16 %v143
  %v181 = vunpack.c.l.b16 %v144
  %v182 = vunpack.c.l.b16 %v145
  %v183 = vunpack.c.l.b16 %v146
  %v184 = vunpack.c.l.b16 %v147
  %v185 = vunpack.c.l.b16 %v148
  %v186 = vunpack.c.l.b16 %v149
  %v187 = vunpack.c.l.b16 %v150
  %v188 = vunpack.c.l.b16 %v151
  %v189 = vunpack.c.l.b16 %v152
  %v190 = vunpack.c.l.b16 %v153
  %v191 = vunpack.c.l.b16 %v154
  %v192 = vunpack.c.l.b16 %v155
  %v193 = vunpack.c.l.b16 %v156
  %v194 = vunpack.c.l.b16 %v157
  %v195 = vpack.c.b16 %v180, %v179
  %v196 = vpack.c.b16 %v182, %v181
  %v197 = vpack.c.b16 %v184, %v183
  %v198 = vpack.c.b16 %v186, %v185
  %v199 = vpack.c.b16 %v188, %v187
  %v200 = vpack.c.b16 %v190, %v189
  %v201 = vpack.c.b16 %v192, %v191
  %v202 = vpack.c.b16 %v194, %v193
  %211 = vmatpush.bf16.msra.mxu0 %v202
  %212 = vmatpush.bf16.msra.mxu0 %v201
  %213 = vmatpush.bf16.msra.mxu0 %v200
  %214 = vmatpush.bf16.msra.mxu0 %v199
  %215 = vmatpush.bf16.msra.mxu0 %v198
  %216 = vmatpush.bf16.msra.mxu0 %v197
  %217 = vmatpush.bf16.msra.mxu0 %v196
  %218 = vmatpush.bf16.msra.mxu0 %v195
  %219 = vmatmul.bf16.gmra.mxu0 %v140
  %v220 = vpop.f32.mrf.mxu0
  %v221 = vadd.f32 %v161, %v220
  %v222 = vpop.f32.mrf.mxu0
  %223 = vdwg.mxu0
  %v224 = vtanh.pop %v221
  %v225 = vpack.c.bf16 %v224, %v224
  %s226 = scalar_lea.vmem %s3, 128
  %v227 = vld [vmem:[%s226] sm:$0xf]
  %v228 = vld [vmem:[%s226 + $0x4] sm:$0xf]
  %v229 = vld [vmem:[%s226 + $0x8] sm:$0xf]
  %v230 = vld [vmem:[%s226 + $0xc] sm:$0xf]
  %v231 = vld [vmem:[%s226 + $0x10] sm:$0xf]
  %v232 = vld [vmem:[%s226 + $0x14] sm:$0xf]
  %v233 = vld [vmem:[%s226 + $0x18] sm:$0xf]
  %v234 = vld [vmem:[%s226 + $0x1c] sm:$0xf]
  %v235 = vld [vmem:[%s226 + $0x20] sm:$0xf]
  %v236 = vld [vmem:[%s226 + $0x24] sm:$0xf]
  %v237 = vld [vmem:[%s226 + $0x28] sm:$0xf]
  %v238 = vld [vmem:[%s226 + $0x2c] sm:$0xf]
  %v239 = vld [vmem:[%s226 + $0x30] sm:$0xf]
  %v240 = vld [vmem:[%s226 + $0x34] sm:$0xf]
  %v241 = vld [vmem:[%s226 + $0x38] sm:$0xf]
  %v242 = vld [vmem:[%s226 + $0x3c] sm:$0xf]
  %s243 = scalar_lea.vmem %s4, 2
  %v244 = vld [vmem:[%s243] sm:$0x1]
  %v246 = vperm.slane %v244, 0
  %v264 = vunpack.c.l.b16 %v227
  %v265 = vunpack.c.l.b16 %v228
  %v266 = vunpack.c.l.b16 %v229
  %v267 = vunpack.c.l.b16 %v230
  %v268 = vunpack.c.l.b16 %v231
  %v269 = vunpack.c.l.b16 %v232
  %v270 = vunpack.c.l.b16 %v233
  %v271 = vunpack.c.l.b16 %v234
  %v272 = vunpack.c.l.b16 %v235
  %v273 = vunpack.c.l.b16 %v236
  %v274 = vunpack.c.l.b16 %v237
  %v275 = vunpack.c.l.b16 %v238
  %v276 = vunpack.c.l.b16 %v239
  %v277 = vunpack.c.l.b16 %v240
  %v278 = vunpack.c.l.b16 %v241
  %v279 = vunpack.c.l.b16 %v242
  %v280 = vpack.c.b16 %v265, %v264
  %v281 = vpack.c.b16 %v267, %v266
  %v282 = vpack.c.b16 %v269, %v268
  %v283 = vpack.c.b16 %v271, %v270
  %v284 = vpack.c.b16 %v273, %v272
  %v285 = vpack.c.b16 %v275, %v274
  %v286 = vpack.c.b16 %v277, %v276
  %v287 = vpack.c.b16 %v279, %v278
  %296 = vmatpush.bf16.msra.mxu0 %v287
  %297 = vmatpush.bf16.msra.mxu0 %v286
  %298 = vmatpush.bf16.msra.mxu0 %v285
  %299 = vmatpush.bf16.msra.mxu0 %v284
  %300 = vmatpush.bf16.msra.mxu0 %v283
  %301 = vmatpush.bf16.msra.mxu0 %v282
  %302 = vmatpush.bf16.msra.mxu0 %v281
  %303 = vmatpush.bf16.msra.mxu0 %v280
  %304 = vmatmul.bf16.gmra.mxu0 %v225
  %v305 = vpop.f32.mrf.mxu0
  %v306 = vadd.f32 %v246, %v305
  %v307 = vpop.f32.mrf.mxu0
  %308 = vdwg.mxu0
  %v309 = vtanh.pop %v306
  %v310 = vpack.c.bf16 %v309, %v309
  %s311 = scalar_lea.vmem %s3, 192
  %v312 = vld [vmem:[%s311] sm:$0xf]
  %v313 = vld [vmem:[%s311 + $0x4] sm:$0xf]
  %v314 = vld [vmem:[%s311 + $0x8] sm:$0xf]
  %v315 = vld [vmem:[%s311 + $0xc] sm:$0xf]
  %v316 = vld [vmem:[%s311 + $0x10] sm:$0xf]
  %v317 = vld [vmem:[%s311 + $0x14] sm:$0xf]
  %v318 = vld [vmem:[%s311 + $0x18] sm:$0xf]
  %v319 = vld [vmem:[%s311 + $0x1c] sm:$0xf]
  %v320 = vld [vmem:[%s311 + $0x20] sm:$0xf]
  %v321 = vld [vmem:[%s311 + $0x24] sm:$0xf]
  %v322 = vld [vmem:[%s311 + $0x28] sm:$0xf]
  %v323 = vld [vmem:[%s311 + $0x2c] sm:$0xf]
  %v324 = vld [vmem:[%s311 + $0x30] sm:$0xf]
  %v325 = vld [vmem:[%s311 + $0x34] sm:$0xf]
  %v326 = vld [vmem:[%s311 + $0x38] sm:$0xf]
  %v327 = vld [vmem:[%s311 + $0x3c] sm:$0xf]
  %s328 = scalar_lea.vmem %s4, 3
  %v329 = vld [vmem:[%s328] sm:$0x1]
  %v331 = vperm.slane %v329, 0
  %v349 = vunpack.c.l.b16 %v312
  %v350 = vunpack.c.l.b16 %v313
  %v351 = vunpack.c.l.b16 %v314
  %v352 = vunpack.c.l.b16 %v315
  %v353 = vunpack.c.l.b16 %v316
  %v354 = vunpack.c.l.b16 %v317
  %v355 = vunpack.c.l.b16 %v318
  %v356 = vunpack.c.l.b16 %v319
  %v357 = vunpack.c.l.b16 %v320
  %v358 = vunpack.c.l.b16 %v321
  %v359 = vunpack.c.l.b16 %v322
  %v360 = vunpack.c.l.b16 %v323
  %v361 = vunpack.c.l.b16 %v324
  %v362 = vunpack.c.l.b16 %v325
  %v363 = vunpack.c.l.b16 %v326
  %v364 = vunpack.c.l.b16 %v327
  %v365 = vpack.c.b16 %v350, %v349
  %v366 = vpack.c.b16 %v352, %v351
  %v367 = vpack.c.b16 %v354, %v353
  %v368 = vpack.c.b16 %v356, %v355
  %v369 = vpack.c.b16 %v358, %v357
  %v370 = vpack.c.b16 %v360, %v359
  %v371 = vpack.c.b16 %v362, %v361
  %v372 = vpack.c.b16 %v364, %v363
  %381 = vmatpush.bf16.msra.mxu0 %v372
  %382 = vmatpush.bf16.msra.mxu0 %v371
  %383 = vmatpush.bf16.msra.mxu0 %v370
  %384 = vmatpush.bf16.msra.mxu0 %v369
  %385 = vmatpush.bf16.msra.mxu0 %v368
  %386 = vmatpush.bf16.msra.mxu0 %v367
  %387 = vmatpush.bf16.msra.mxu0 %v366
  %388 = vmatpush.bf16.msra.mxu0 %v365
  %389 = vmatmul.bf16.gmra.mxu0 %v310
  %v390 = vpop.f32.mrf.mxu0
  %v391 = vadd.f32 %v331, %v390
  %v392 = vpop.f32.mrf.mxu0
  %393 = vdwg.mxu0
  %v394 = vtanh.pop %v391
  %v395 = vpack.c.bf16 %v394, %v394
  %s396 = scalar_lea.vmem %s3, 256
  %v397 = vld [vmem:[%s396] sm:$0xf]
  %v398 = vld [vmem:[%s396 + $0x4] sm:$0xf]
  %v399 = vld [vmem:[%s396 + $0x8] sm:$0xf]
  %v400 = vld [vmem:[%s396 + $0xc] sm:$0xf]
  %v401 = vld [vmem:[%s396 + $0x10] sm:$0xf]
  %v402 = vld [vmem:[%s396 + $0x14] sm:$0xf]
  %v403 = vld [vmem:[%s396 + $0x18] sm:$0xf]
  %v404 = vld [vmem:[%s396 + $0x1c] sm:$0xf]
  %v405 = vld [vmem:[%s396 + $0x20] sm:$0xf]
  %v406 = vld [vmem:[%s396 + $0x24] sm:$0xf]
  %v407 = vld [vmem:[%s396 + $0x28] sm:$0xf]
  %v408 = vld [vmem:[%s396 + $0x2c] sm:$0xf]
  %v409 = vld [vmem:[%s396 + $0x30] sm:$0xf]
  %v410 = vld [vmem:[%s396 + $0x34] sm:$0xf]
  %v411 = vld [vmem:[%s396 + $0x38] sm:$0xf]
  %v412 = vld [vmem:[%s396 + $0x3c] sm:$0xf]
  %s413 = scalar_lea.vmem %s4, 4
  %v414 = vld [vmem:[%s413] sm:$0x1]
  %v416 = vperm.slane %v414, 0
  %v434 = vunpack.c.l.b16 %v397
  %v435 = vunpack.c.l.b16 %v398
  %v436 = vunpack.c.l.b16 %v399
  %v437 = vunpack.c.l.b16 %v400
  %v438 = vunpack.c.l.b16 %v401
  %v439 = vunpack.c.l.b16 %v402
  %v440 = vunpack.c.l.b16 %v403
  %v441 = vunpack.c.l.b16 %v404
  %v442 = vunpack.c.l.b16 %v405
  %v443 = vunpack.c.l.b16 %v406
  %v444 = vunpack.c.l.b16 %v407
  %v445 = vunpack.c.l.b16 %v408
  %v446 = vunpack.c.l.b16 %v409
  %v447 = vunpack.c.l.b16 %v410
  %v448 = vunpack.c.l.b16 %v411
  %v449 = vunpack.c.l.b16 %v412
  %v450 = vpack.c.b16 %v435, %v434
  %v451 = vpack.c.b16 %v437, %v436
  %v452 = vpack.c.b16 %v439, %v438
  %v453 = vpack.c.b16 %v441, %v440
  %v454 = vpack.c.b16 %v443, %v442
  %v455 = vpack.c.b16 %v445, %v444
  %v456 = vpack.c.b16 %v447, %v446
  %v457 = vpack.c.b16 %v449, %v448
  %466 = vmatpush.bf16.msra.mxu0 %v457
  %467 = vmatpush.bf16.msra.mxu0 %v456
  %468 = vmatpush.bf16.msra.mxu0 %v455
  %469 = vmatpush.bf16.msra.mxu0 %v454
  %470 = vmatpush.bf16.msra.mxu0 %v453
  %471 = vmatpush.bf16.msra.mxu0 %v452
  %472 = vmatpush.bf16.msra.mxu0 %v451
  %473 = vmatpush.bf16.msra.mxu0 %v450
  %474 = vmatmul.bf16.gmra.mxu0 %v395
  %v475 = vpop.f32.mrf.mxu0
  %v476 = vadd.f32 %v416, %v475
  %v477 = vpop.f32.mrf.mxu0
  %478 = vdwg.mxu0
  %v479 = vtanh.pop %v476
  %v480 = vpack.c.bf16 %v479, %v479
  %s481 = scalar_lea.vmem %s3, 320
  %v482 = vld [vmem:[%s481] sm:$0xf]
  %v483 = vld [vmem:[%s481 + $0x4] sm:$0xf]
  %v484 = vld [vmem:[%s481 + $0x8] sm:$0xf]
  %v485 = vld [vmem:[%s481 + $0xc] sm:$0xf]
  %v486 = vld [vmem:[%s481 + $0x10] sm:$0xf]
  %v487 = vld [vmem:[%s481 + $0x14] sm:$0xf]
  %v488 = vld [vmem:[%s481 + $0x18] sm:$0xf]
  %v489 = vld [vmem:[%s481 + $0x1c] sm:$0xf]
  %v490 = vld [vmem:[%s481 + $0x20] sm:$0xf]
  %v491 = vld [vmem:[%s481 + $0x24] sm:$0xf]
  %v492 = vld [vmem:[%s481 + $0x28] sm:$0xf]
  %v493 = vld [vmem:[%s481 + $0x2c] sm:$0xf]
  %v494 = vld [vmem:[%s481 + $0x30] sm:$0xf]
  %v495 = vld [vmem:[%s481 + $0x34] sm:$0xf]
  %v496 = vld [vmem:[%s481 + $0x38] sm:$0xf]
  %v497 = vld [vmem:[%s481 + $0x3c] sm:$0xf]
  %s498 = scalar_lea.vmem %s4, 5
  %v499 = vld [vmem:[%s498] sm:$0x1]
  %v501 = vperm.slane %v499, 0
  %v519 = vunpack.c.l.b16 %v482
  %v520 = vunpack.c.l.b16 %v483
  %v521 = vunpack.c.l.b16 %v484
  %v522 = vunpack.c.l.b16 %v485
  %v523 = vunpack.c.l.b16 %v486
  %v524 = vunpack.c.l.b16 %v487
  %v525 = vunpack.c.l.b16 %v488
  %v526 = vunpack.c.l.b16 %v489
  %v527 = vunpack.c.l.b16 %v490
  %v528 = vunpack.c.l.b16 %v491
  %v529 = vunpack.c.l.b16 %v492
  %v530 = vunpack.c.l.b16 %v493
  %v531 = vunpack.c.l.b16 %v494
  %v532 = vunpack.c.l.b16 %v495
  %v533 = vunpack.c.l.b16 %v496
  %v534 = vunpack.c.l.b16 %v497
  %v535 = vpack.c.b16 %v520, %v519
  %v536 = vpack.c.b16 %v522, %v521
  %v537 = vpack.c.b16 %v524, %v523
  %v538 = vpack.c.b16 %v526, %v525
  %v539 = vpack.c.b16 %v528, %v527
  %v540 = vpack.c.b16 %v530, %v529
  %v541 = vpack.c.b16 %v532, %v531
  %v542 = vpack.c.b16 %v534, %v533
  %551 = vmatpush.bf16.msra.mxu0 %v542
  %552 = vmatpush.bf16.msra.mxu0 %v541
  %553 = vmatpush.bf16.msra.mxu0 %v540
  %554 = vmatpush.bf16.msra.mxu0 %v539
  %555 = vmatpush.bf16.msra.mxu0 %v538
  %556 = vmatpush.bf16.msra.mxu0 %v537
  %557 = vmatpush.bf16.msra.mxu0 %v536
  %558 = vmatpush.bf16.msra.mxu0 %v535
  %559 = vmatmul.bf16.gmra.mxu0 %v480
  %v560 = vpop.f32.mrf.mxu0
  %v561 = vadd.f32 %v501, %v560
  %v562 = vpop.f32.mrf.mxu0
  %563 = vdwg.mxu0
  %v564 = vtanh.pop %v561
  %v565 = vpack.c.bf16 %v564, %v564
  %s566 = scalar_lea.vmem %s3, 384
  %v567 = vld [vmem:[%s566] sm:$0xf]
  %v568 = vld [vmem:[%s566 + $0x4] sm:$0xf]
  %v569 = vld [vmem:[%s566 + $0x8] sm:$0xf]
  %v570 = vld [vmem:[%s566 + $0xc] sm:$0xf]
  %v571 = vld [vmem:[%s566 + $0x10] sm:$0xf]
  %v572 = vld [vmem:[%s566 + $0x14] sm:$0xf]
  %v573 = vld [vmem:[%s566 + $0x18] sm:$0xf]
  %v574 = vld [vmem:[%s566 + $0x1c] sm:$0xf]
  %v575 = vld [vmem:[%s566 + $0x20] sm:$0xf]
  %v576 = vld [vmem:[%s566 + $0x24] sm:$0xf]
  %v577 = vld [vmem:[%s566 + $0x28] sm:$0xf]
  %v578 = vld [vmem:[%s566 + $0x2c] sm:$0xf]
  %v579 = vld [vmem:[%s566 + $0x30] sm:$0xf]
  %v580 = vld [vmem:[%s566 + $0x34] sm:$0xf]
  %v581 = vld [vmem:[%s566 + $0x38] sm:$0xf]
  %v582 = vld [vmem:[%s566 + $0x3c] sm:$0xf]
  %s583 = scalar_lea.vmem %s4, 6
  %v584 = vld [vmem:[%s583] sm:$0x1]
  %v586 = vperm.slane %v584, 0
  %v604 = vunpack.c.l.b16 %v567
  %v605 = vunpack.c.l.b16 %v568
  %v606 = vunpack.c.l.b16 %v569
  %v607 = vunpack.c.l.b16 %v570
  %v608 = vunpack.c.l.b16 %v571
  %v609 = vunpack.c.l.b16 %v572
  %v610 = vunpack.c.l.b16 %v573
  %v611 = vunpack.c.l.b16 %v574
  %v612 = vunpack.c.l.b16 %v575
  %v613 = vunpack.c.l.b16 %v576
  %v614 = vunpack.c.l.b16 %v577
  %v615 = vunpack.c.l.b16 %v578
  %v616 = vunpack.c.l.b16 %v579
  %v617 = vunpack.c.l.b16 %v580
  %v618 = vunpack.c.l.b16 %v581
  %v619 = vunpack.c.l.b16 %v582
  %v620 = vpack.c.b16 %v605, %v604
  %v621 = vpack.c.b16 %v607, %v606
  %v622 = vpack.c.b16 %v609, %v608
  %v623 = vpack.c.b16 %v611, %v610
  %v624 = vpack.c.b16 %v613, %v612
  %v625 = vpack.c.b16 %v615, %v614
  %v626 = vpack.c.b16 %v617, %v616
  %v627 = vpack.c.b16 %v619, %v618
  %636 = vmatpush.bf16.msra.mxu0 %v627
  %637 = vmatpush.bf16.msra.mxu0 %v626
  %638 = vmatpush.bf16.msra.mxu0 %v625
  %639 = vmatpush.bf16.msra.mxu0 %v624
  %640 = vmatpush.bf16.msra.mxu0 %v623
  %641 = vmatpush.bf16.msra.mxu0 %v622
  %642 = vmatpush.bf16.msra.mxu0 %v621
  %643 = vmatpush.bf16.msra.mxu0 %v620
  %644 = vmatmul.bf16.gmra.mxu0 %v565
  %v645 = vpop.f32.mrf.mxu0
  %v646 = vadd.f32 %v586, %v645
  %v647 = vpop.f32.mrf.mxu0
  %648 = vdwg.mxu0
  %v649 = vtanh.pop %v646
  %v650 = vpack.c.bf16 %v649, %v649
  %v651 = vld [vmem:[%s5] sm:$0xf]
  %v652 = vld [vmem:[%s5 + $0x4] sm:$0xf]
  %v653 = vld [vmem:[%s5 + $0x8] sm:$0xf]
  %v654 = vld [vmem:[%s5 + $0xc] sm:$0xf]
  %v655 = vld [vmem:[%s5 + $0x10] sm:$0xf]
  %v656 = vld [vmem:[%s5 + $0x14] sm:$0xf]
  %v657 = vld [vmem:[%s5 + $0x18] sm:$0xf]
  %v658 = vld [vmem:[%s5 + $0x1c] sm:$0xf]
  %v659 = vld [vmem:[%s5 + $0x20] sm:$0xf]
  %v660 = vld [vmem:[%s5 + $0x24] sm:$0xf]
  %v661 = vld [vmem:[%s5 + $0x28] sm:$0xf]
  %v662 = vld [vmem:[%s5 + $0x2c] sm:$0xf]
  %v663 = vld [vmem:[%s5 + $0x30] sm:$0xf]
  %v664 = vld [vmem:[%s5 + $0x34] sm:$0xf]
  %v665 = vld [vmem:[%s5 + $0x38] sm:$0xf]
  %v666 = vld [vmem:[%s5 + $0x3c] sm:$0xf]
  %v667 = vld [vmem:[%s6] sm:$0x1]
  %v669 = vperm.slane %v667, 0
  %v687 = vunpack.c.l.b16 %v651
  %v688 = vunpack.c.l.b16 %v652
  %v689 = vunpack.c.l.b16 %v653
  %v690 = vunpack.c.l.b16 %v654
  %v691 = vunpack.c.l.b16 %v655
  %v692 = vunpack.c.l.b16 %v656
  %v693 = vunpack.c.l.b16 %v657
  %v694 = vunpack.c.l.b16 %v658
  %v695 = vunpack.c.l.b16 %v659
  %v696 = vunpack.c.l.b16 %v660
  %v697 = vunpack.c.l.b16 %v661
  %v698 = vunpack.c.l.b16 %v662
  %v699 = vunpack.c.l.b16 %v663
  %v700 = vunpack.c.l.b16 %v664
  %v701 = vunpack.c.l.b16 %v665
  %v702 = vunpack.c.l.b16 %v666
  %v703 = vpack.c.b16 %v688, %v687
  %v704 = vpack.c.b16 %v690, %v689
  %v705 = vpack.c.b16 %v692, %v691
  %v706 = vpack.c.b16 %v694, %v693
  %v707 = vpack.c.b16 %v696, %v695
  %v708 = vpack.c.b16 %v698, %v697
  %v709 = vpack.c.b16 %v700, %v699
  %v710 = vpack.c.b16 %v702, %v701
  %719 = vmatpush.bf16.msra.mxu0 %v710
  %720 = vmatpush.bf16.msra.mxu0 %v709
  %721 = vmatpush.bf16.msra.mxu0 %v708
  %722 = vmatpush.bf16.msra.mxu0 %v707
  %723 = vmatpush.bf16.msra.mxu0 %v706
  %724 = vmatpush.bf16.msra.mxu0 %v705
  %725 = vmatpush.bf16.msra.mxu0 %v704
  %726 = vmatpush.bf16.msra.mxu0 %v703
  %727 = vmatmul.bf16.gmra.mxu0 %v650
  %v728 = vpop.f32.mrf.mxu0
  %v729 = vadd.f32 %v669, %v728
  %v730 = vpop.f32.mrf.mxu0
  %731 = vdwg.mxu0
  %vm732 = vcmask 64512
  %733 = vst.msk [vmem:[%s7] sm:$0xff] %vm732, %v729
  // Predicated region
  $region30: #{pinn_forward.1} parent=0 // pred_check
    _
  $region31: #{pinn_forward.1} parent=0 // pred_check_branch
    %735 = sbr.rel (0) target = $region33
  $region32: #{pinn_forward.1} parent=0 // pred_region
    _
  $region33: #{pinn_forward.1} parent=0 // pred_fallthru
    _
  // Predicated region
  $region34: #{pinn_forward.1} parent=0 // pred_check
    _
  $region35: #{pinn_forward.1} parent=0 // pred_check_branch
    %737 = sbr.rel (0) target = $region37
  $region36: #{pinn_forward.1} parent=0 // pred_region
    _
  $region37: #{pinn_forward.1} parent=0 // pred_fallthru
    _

</llo_original>
